<compile_context>
chip_gen: v6e
topology: v6e:2x2x1
jax: 0.10.0
libtpu: 0.0.40
codegen_flags: <defaults>
</compile_context>

<pallas_src>
import functools

import jax
import jax.numpy as jnp
from jax.experimental import pallas as pl
from jax.experimental.pallas import tpu as pltpu


def _round_up(n, m):
    return ((n + m - 1) // m) * m


def _bf16_eup_supported():
    """True on chips with packed-bf16 VPU/EUP (v6e, v7x); False on v5e and older."""
    try:
        kind = jax.devices()[0].device_kind.lower()
    except Exception:
        return False
    return not any(tag in kind for tag in ("v2", "v3", "v4", "v5"))


def mlp_kernel(x_ref, w1_ref, b1_ref, w2_ref, b2_ref, o_ref, *, act_dtype):
    # Layer 1 on the MXU: (TB, 12) @ (12, 640), bf16 operands, f32 accumulate.
    h = jnp.dot(
        x_ref[...].astype(jnp.bfloat16),
        w1_ref[...],                       # already bf16 (cast once in the wrapper)
        preferred_element_type=jnp.float32,
    )
    # EUP tanh: bf16 on v6e/v7x (halves the pushes), f32 on v5e.
    h = jnp.tanh((h + b1_ref[...]).astype(act_dtype))

    # Layer 2 (640 -> 1): VPU multiply in act_dtype + f32 XLU lane reduce.
    y = jnp.sum((h * w2_ref[...]).astype(jnp.float32), axis=-1, keepdims=True)

    # Lane-dense epilogue: (TB, 1) -> (TB//128, 128) relayout (rides the idle
    # XLU slot), then scalar bias + sigmoid on dense vregs, then unmasked store.
    rows = o_ref.shape[1]
    y = y.reshape(rows, 128)
    y = jax.nn.sigmoid(y + b2_ref[0, 0])   # scalar bias read from SMEM
    o_ref[0] = y.astype(o_ref.dtype)


def multilayer_ps_forward(x, fc1_w, fc1_b, out_w, out_b, *, use_bf16_act=None):
    """Forward pass of MultilayerPs.

    x:      (B, 12) f32
    fc1_w:  (600, 12) f32   (PyTorch fc1.weight layout)
    fc1_b:  (600,)   f32
    out_w:  (1, 600) f32    (PyTorch out.weight layout)
    out_b:  (1,)     f32
    returns (B, 1) f32 == sigmoid(tanh(x @ fc1_w.T + fc1_b) @ out_w.T + out_b)
    """
    B, K = x.shape
    H = fc1_w.shape[0]
    Hp = _round_up(H, 128)                 # 600 -> 640: lane-dense hidden

    if use_bf16_act is None:
        use_bf16_act = _bf16_eup_supported()
    act_dtype = jnp.bfloat16 if use_bf16_act else jnp.float32

    # Padding-aware batch tiling: tiles are multiples of 128 (lane-dense out),
    # split as evenly as possible, capped so hidden temporaries stay well under
    # the scoped VMEM limit on every generation (incl. v7x's 64 MiB per TC).
    max_tile = 4096 if use_bf16_act else 2048
    num_tiles = pl.cdiv(B, max_tile)
    if num_tiles == 1 and B > 128:
        num_tiles = 2                      # let v7x shard the grid over its 2 TCs
    TB = _round_up(pl.cdiv(B, num_tiles), 128)
    num_tiles = pl.cdiv(B, TB)
    Bp = num_tiles * TB
    rows = TB // 128

    # (in, out) weight layout + exact zero padding of the hidden dim:
    # padded w1 columns / b1 entries are zero -> tanh(0)=0, padded w2 rows zero.
    w1 = jnp.zeros((K, Hp), jnp.float32).at[:, :H].set(fc1_w.T).astype(jnp.bfloat16)
    b1 = jnp.zeros((1, Hp), jnp.float32).at[:, :H].set(fc1_b)
    w2 = jnp.zeros((1, Hp), jnp.float32).at[:, :H].set(out_w.reshape(1, H)).astype(act_dtype)
    b2 = jnp.asarray(out_b, jnp.float32).reshape(1, 1)

    xp = x if Bp == B else jnp.pad(x, ((0, Bp - B), (0, 0)))

    out = pl.pallas_call(
        functools.partial(mlp_kernel, act_dtype=act_dtype),
        out_shape=jax.ShapeDtypeStruct((num_tiles, rows, 128), jnp.float32),
        grid=(num_tiles,),
        in_specs=[
            pl.BlockSpec((TB, K), lambda i: (i, 0)),            # streamed per tile
            pl.BlockSpec((K, Hp), lambda i: (0, 0)),            # resident weights
            pl.BlockSpec((1, Hp), lambda i: (0, 0)),            # resident bias 1
            pl.BlockSpec((1, Hp), lambda i: (0, 0)),            # resident w2 row
            pl.BlockSpec(memory_space=pltpu.MemorySpace.SMEM),  # scalar bias 2
        ],
        out_specs=pl.BlockSpec((1, rows, 128), lambda i: (i, 0, 0)),
        compiler_params=pltpu.CompilerParams(
            dimension_semantics=("parallel",),   # batch axis shards across TCs
            vmem_limit_bytes=48 * 1024 * 1024,
        ),
    )(xp, w1, b1, w2, b2)

    # Undo the lane-dense relayout: (tile, 128-row group, lane) row-major is
    # exactly batch order; padded rows sit at the tail and are sliced off.
    return out.reshape(Bp, 1)[:B]


def init_params(key):
    """Deterministic synthetic init matching nn.Linear's default uniform init."""
    k1, k2, k3, k4 = jax.random.split(key, 4)
    bound1 = 1.0 / jnp.sqrt(12.0)
    bound2 = 1.0 / jnp.sqrt(600.0)
    fc1_w = jax.random.uniform(k1, (600, 12), jnp.float32, -bound1, bound1)
    fc1_b = jax.random.uniform(k2, (600,), jnp.float32, -bound1, bound1)
    out_w = jax.random.uniform(k3, (1, 600), jnp.float32, -bound2, bound2)
    out_b = jax.random.uniform(k4, (1,), jnp.float32, -bound2, bound2)
    return fc1_w, fc1_b, out_w, out_b


if __name__ == "__main__":
    key = jax.random.PRNGKey(0)
    kx, kp = jax.random.split(key)

    batch = 8
    x = jax.random.normal(kx, (batch, 12), jnp.float32)
    fc1_w, fc1_b, out_w, out_b = init_params(kp)

    out = multilayer_ps_forward(x, fc1_w, fc1_b, out_w, out_b)
    out = jax.block_until_ready(out)

    # Reference check in plain JAX (same math as the PyTorch forward).
    ref = jax.nn.sigmoid(jnp.tanh(x @ fc1_w.T + fc1_b) @ out_w.T + out_b)
    assert out.shape == (batch, 1)
    # bf16 activations (v6e/v7x) need a slightly looser tolerance than the
    # bf16-MXU-operand-only f32 path (v5e).
    tol = 2e-2 if _bf16_eup_supported() else 5e-3
    assert jnp.allclose(out, ref, atol=tol, rtol=tol), float(jnp.max(jnp.abs(out - ref)))

    print("KERNEL_OK")
</pallas_src>

<mosaic_0001>
module attributes {stable_mosaic.version = 11 : i64} {
  func.func @mlp_kernel(%arg0: i32, %arg1: memref<128x12xf32, #tpu.memory_space<vmem>>, %arg2: memref<12x640xbf16, #tpu.memory_space<vmem>>, %arg3: memref<1x640xf32, #tpu.memory_space<vmem>>, %arg4: memref<1x640xbf16, #tpu.memory_space<vmem>>, %arg5: memref<1x1xf32, #tpu.memory_space<smem>>, %arg6: memref<1x1x128xf32, #tpu.memory_space<vmem>>) attributes {dimension_semantics = [#tpu.dimension_semantics<parallel>], iteration_bounds = array<i64: 1>, scalar_prefetch = 0 : i64, scratch_operands = 0 : i64, tpu.core_type = #tpu.core_type<tc>, window_params = [{transform_indices = @transform_0, window_bounds = array<i64: 128, 12>}, {pipeline_mode = #tpu.pipeline_mode<synchronous>, transform_indices = @transform_1, window_bounds = array<i64: 12, 640>}, {pipeline_mode = #tpu.pipeline_mode<synchronous>, transform_indices = @transform_2, window_bounds = array<i64: 1, 640>}, {pipeline_mode = #tpu.pipeline_mode<synchronous>, transform_indices = @transform_3, window_bounds = array<i64: 1, 640>}, {transform_indices = @transform_4, window_bounds = array<i64: 1, 1>}, {transform_indices = @transform_5, window_bounds = array<i64: 1, 1, 128>}]} {
    %c0 = arith.constant 0 : index
    %c0_0 = arith.constant 0 : index
    %0 = vector.load %arg1[%c0, %c0_0] : memref<128x12xf32, #tpu.memory_space<vmem>>, vector<128x12xf32>
    %1 = arith.truncf %0 : vector<128x12xf32> to vector<128x12xbf16>
    %c0_1 = arith.constant 0 : index
    %c0_2 = arith.constant 0 : index
    %2 = vector.load %arg2[%c0_1, %c0_2] : memref<12x640xbf16, #tpu.memory_space<vmem>>, vector<12x640xbf16>
    %cst = arith.constant dense<0.000000e+00> : vector<128x640xf32>
    %3 = tpu.matmul %1, %2, %cst {dimension_numbers = #tpu.dot_dimension_numbers<[1], [0], [0], [1], [0, 0, 1, 1], [], []>} : vector<128x12xbf16>, vector<12x640xbf16>, vector<128x640xf32> -> vector<128x640xf32>
    %c0_3 = arith.constant 0 : index
    %c0_4 = arith.constant 0 : index
    %4 = vector.load %arg3[%c0_3, %c0_4] : memref<1x640xf32, #tpu.memory_space<vmem>>, vector<1x640xf32>
    %5 = vector.broadcast %4 : vector<1x640xf32> to vector<128x640xf32>
    %6 = arith.addf %3, %5 : vector<128x640xf32>
    %7 = arith.truncf %6 : vector<128x640xf32> to vector<128x640xbf16>
    %8 = math.tanh %7 : vector<128x640xbf16>
    %c0_5 = arith.constant 0 : index
    %c0_6 = arith.constant 0 : index
    %9 = vector.load %arg4[%c0_5, %c0_6] : memref<1x640xbf16, #tpu.memory_space<vmem>>, vector<1x640xbf16>
    %10 = vector.broadcast %9 : vector<1x640xbf16> to vector<128x640xbf16>
    %11 = arith.mulf %8, %10 : vector<128x640xbf16>
    %12 = arith.extf %11 : vector<128x640xbf16> to vector<128x640xf32>
    %cst_7 = arith.constant dense<0.000000e+00> : vector<128xf32>
    %13 = vector.multi_reduction <add>, %12, %cst_7 [1] : vector<128x640xf32> to vector<128xf32>
    %14 = vector.shape_cast %13 : vector<128xf32> to vector<128x1xf32>
    %15 = vector.shape_cast %14 : vector<128x1xf32> to vector<1x128xf32>
    %c0_8 = arith.constant 0 : index
    %c0_9 = arith.constant 0 : index
    %16 = memref.load %arg5[%c0_8, %c0_9] : memref<1x1xf32, #tpu.memory_space<smem>>
    %17 = vector.broadcast %16 : f32 to vector<1x128xf32>
    %18 = arith.addf %15, %17 : vector<1x128xf32>
    %19 = arith.negf %18 : vector<1x128xf32>
    %20 = math.exp %19 : vector<1x128xf32>
    %cst_10 = arith.constant 1.000000e+00 : f32
    %21 = vector.broadcast %cst_10 : f32 to vector<1x128xf32>
    %22 = arith.addf %21, %20 : vector<1x128xf32>
    %23 = arith.divf %21, %22 : vector<1x128xf32>
    %c0_11 = arith.constant 0 : index
    %c0_12 = arith.constant 0 : index
    %c0_13 = arith.constant 0 : index
    %24 = vector.load %arg6[%c0_11, %c0_12, %c0_13] : memref<1x1x128xf32, #tpu.memory_space<vmem>>, vector<1x1x128xf32>
    %25 = vector.shape_cast %24 : vector<1x1x128xf32> to vector<1x128xf32>
    %26 = vector.shape_cast %23 : vector<1x128xf32> to vector<1x1x128xf32>
    tpu.vector_store %arg6[%c0_11, %c0_12, %c0_13], %26 {strides = array<i32>} : memref<1x1x128xf32, #tpu.memory_space<vmem>>, vector<1x1x128xf32>,
    return
  }
  func.func @transform_0(%arg0: i32) -> (i32, i32) {
    %c0_i32 = arith.constant 0 : i32
    %c0_i32_0 = arith.constant 0 : i32
    return %arg0, %c0_i32 : i32, i32
  }
  func.func @transform_1(%arg0: i32) -> (i32, i32) {
    %c0_i32 = arith.constant 0 : i32
    %c0_i32_0 = arith.constant 0 : i32
    %c0_i32_1 = arith.constant 0 : i32
    return %c0_i32, %c0_i32_0 : i32, i32
  }
  func.func @transform_2(%arg0: i32) -> (i32, i32) {
    %c0_i32 = arith.constant 0 : i32
    %c0_i32_0 = arith.constant 0 : i32
    %c0_i32_1 = arith.constant 0 : i32
    return %c0_i32, %c0_i32_0 : i32, i32
  }
  func.func @transform_3(%arg0: i32) -> (i32, i32) {
    %c0_i32 = arith.constant 0 : i32
    %c0_i32_0 = arith.constant 0 : i32
    %c0_i32_1 = arith.constant 0 : i32
    return %c0_i32, %c0_i32_0 : i32, i32
  }
  func.func @transform_4(%arg0: i32) -> (i32, i32) {
    %c0_i32 = arith.constant 0 : i32
    %c0_i32_0 = arith.constant 0 : i32
    %c0_i32_1 = arith.constant 0 : i32
    return %c0_i32, %c0_i32_0 : i32, i32
  }
  func.func @transform_5(%arg0: i32) -> (i32, i32, i32) {
    %c0_i32 = arith.constant 0 : i32
    %c0_i32_0 = arith.constant 0 : i32
    %c0_i32_1 = arith.constant 0 : i32
    return %arg0, %c0_i32, %c0_i32_0 : i32, i32, i32
  }
}

</mosaic_0001>

<llo_original>
// kernel: tpu_custom_call.1
$region0: #{tpu_custom_call.1}
  #allocation0 [shape = 'u32[]', space=smem, size = 0x4, offset = 0x4, fixed_abs, tag = 'smem constant byte address 0x4 - core index']
  #allocation1 [shape = 'u32[144,128]{1,0:T(1,128)}', space=vmem, size = 0x12000, scoped, tag = 'internal scratch']
  #allocation2 [shape = 'f32[1,1]{1,0:T(1,128)S(6)}', space=smem, size = 0x200, scoped, tag = 'scoped memory for tpu_custom_call.1']
  %s0 = inlined_call_operand.vmem [shape: f32[128,12], index: 0, kind: input, shape index: {}]
  %s1 = inlined_call_operand.vmem [shape: bf16[12,640], index: 1, kind: input, shape index: {}]
  %s2 = inlined_call_operand.vmem [shape: f32[1,640], index: 2, kind: input, shape index: {}]
  %s3 = inlined_call_operand.vmem [shape: bf16[1,640], index: 3, kind: input, shape index: {}]
  %s4 = inlined_call_operand.<no memory space> [shape: f32[1,1], index: 4, kind: input, shape index: {}]
  %s5 = inlined_call_operand.hbm [shape: f32[1,1,128], index: 5, kind: output, shape index: {}]
  %s6 = sld [smem:[#allocation0]]
  $region30: #{tpu_custom_call.1} parent=0
    _
  %s8 = ssub.s32 1, %s6
  %s9 = scalar_select 0, %s8, %s6
  %10 = sst [smem:[#allocation2]] %s4
  $region1: #{tpu_custom_call.1} parent=0
    #allocation3 [shape = 'u8[512]{0}', space=vmem, size = 0x400, scoped, tag = 'output window, operand 0, single buffered']
    #allocation4 [shape = 's32[1]{0}', space=sflag, size = 0x4, scoped, tag = 'scoped memory for tpu_custom_call.1']
    %11 = vsyncpa [#allocation4], 0
    // Predicated region
    $region2: #{tpu_custom_call.1} parent=1 // pred_check
      _
    $region3: #{tpu_custom_call.1} parent=1 // pred_check_branch
      %13 = sbr.rel (0) target = $region5
    $region4: #{tpu_custom_call.1} parent=1 // pred_region
      _
    $region5: #{tpu_custom_call.1} parent=1 // pred_fallthru
      _
    // Predicated region
    $region6: #{tpu_custom_call.1} parent=1 // pred_check
      _
    $region7: #{tpu_custom_call.1} parent=1 // pred_check_branch
      %15 = sbr.rel (0) target = $region9
    $region8: #{tpu_custom_call.1} parent=1 // pred_region
      _
    $region9: #{tpu_custom_call.1} parent=1 // pred_fallthru
      _
    // Predicated region
    $region10: #{tpu_custom_call.1} parent=1 // pred_check
      _
    $region11: #{tpu_custom_call.1} parent=1 // pred_check_branch
      %17 = sbr.rel (0) target = $region13
    $region12: #{tpu_custom_call.1} parent=1 // pred_region
      _
    $region13: #{tpu_custom_call.1} parent=1 // pred_fallthru
      _
    // Predicated region
    $region14: #{tpu_custom_call.1} parent=1 // pred_check
      _
    $region15: #{tpu_custom_call.1} parent=1 // pred_check_branch
      %19 = sbr.rel (0) target = $region17
    $region16: #{tpu_custom_call.1} parent=1 // pred_region
      _
    $region17: #{tpu_custom_call.1} parent=1 // pred_fallthru
      _
    // Predicated region
    $region18: #{tpu_custom_call.1} parent=1 // pred_check
      _
    $region19: #{tpu_custom_call.1} parent=1 // pred_check_branch
      %21 = sbr.rel (0) target = $region21
    $region20: #{tpu_custom_call.1} parent=1 // pred_region
      _
    $region21: #{tpu_custom_call.1} parent=1 // pred_fallthru
      _
    %v23 = vld [vmem:[%s0] sm:$0xff]
    %v24 = vld [vmem:[%s0 + $0x8] sm:$0xff]
    %v25 = vld [vmem:[%s0 + $0x10] sm:$0xff]
    %v26 = vld [vmem:[%s0 + $0x18] sm:$0xff]
    %v27 = vld [vmem:[%s0 + $0x20] sm:$0xff]
    %v28 = vld [vmem:[%s0 + $0x28] sm:$0xff]
    %v29 = vld [vmem:[%s0 + $0x30] sm:$0xff]
    %v30 = vld [vmem:[%s0 + $0x38] sm:$0xff]
    %v31 = vld [vmem:[%s0 + $0x40] sm:$0xff]
    %v32 = vld [vmem:[%s0 + $0x48] sm:$0xff]
    %v33 = vld [vmem:[%s0 + $0x50] sm:$0xff]
    %v34 = vld [vmem:[%s0 + $0x58] sm:$0xff]
    %v35 = vld [vmem:[%s0 + $0x60] sm:$0xff]
    %v36 = vld [vmem:[%s0 + $0x68] sm:$0xff]
    %v37 = vld [vmem:[%s0 + $0x70] sm:$0xff]
    %v38 = vld [vmem:[%s0 + $0x78] sm:$0xff]
    %v39 = vpack.c.bf16 %v24, %v23
    %v40 = vpack.c.bf16 %v26, %v25
    %v41 = vpack.c.bf16 %v28, %v27
    %v42 = vpack.c.bf16 %v30, %v29
    %v43 = vpack.c.bf16 %v32, %v31
    %v44 = vpack.c.bf16 %v34, %v33
    %v45 = vpack.c.bf16 %v36, %v35
    %v46 = vpack.c.bf16 %v38, %v37
    %v47 = vld [vmem:[%s1] sm:$0xff]
    %v48 = vld [vmem:[%s1 + $0x8] sm:$0xff]
    %v49 = vld [vmem:[%s1 + $0x10] sm:$0xf]
    %v50 = vld [vmem:[%s1 + $0x14] sm:$0x33]
    %v51 = vld [vmem:[%s1 + $0x1c] sm:$0x33]
    %v52 = vld [vmem:[%s1 + $0x24] sm:$0x3]
    %v53 = vld [vmem:[%s2] sm:$0x1f]
    %v55 = vlaneseq
    %v56 = vshrl.u32 %v55, 7
    %v57 = vsub.s32 0, %v56
    %v58 = vrot.slane %v53, %v57
    %v59 = vlaneseq
    %v60 = vshrl.u32 %v59, 7
    %v61 = vsub.s32 1, %v60
    %v62 = vrot.slane %v53, %v61
    %v63 = vlaneseq
    %v64 = vshrl.u32 %v63, 7
    %v65 = vsub.s32 2, %v64
    %v66 = vrot.slane %v53, %v65
    %v67 = vlaneseq
    %v68 = vshrl.u32 %v67, 7
    %v69 = vsub.s32 3, %v68
    %v70 = vrot.slane %v53, %v69
    %v71 = vlaneseq
    %v72 = vshrl.u32 %v71, 7
    %v73 = vsub.s32 4, %v72
    %v74 = vrot.slane %v53, %v73
    %v86 = vunpack.c.l.b16 %v47
    %v87 = vunpack.c.h.b16 %v47
    %v88 = vunpack.c.l.b16 %v48
    %v89 = vunpack.c.h.b16 %v48
    %v90 = vunpack.c.l.b16 %v49
    %v91 = vunpack.c.l.b16 %v50
    %v92 = vunpack.c.h.b16 %v50
    %v93 = vunpack.c.l.b16 %v51
    %v94 = vunpack.c.h.b16 %v51
    %v95 = vunpack.c.l.b16 %v52
    %v96 = vpack.c.b16 %v91, %v86
    %v97 = vpack.c.b16 %v92, %v87
    %v98 = vpack.c.b16 %v93, %v88
    %v99 = vpack.c.b16 %v94, %v89
    %v100 = vpack.c.b16 %v95, %v90
    %vm101 = vcmask 97280
    %v103 = vsel %vm101, %v39, 0
    %v106 = vsel %vm101, %v40, 0
    %v109 = vsel %vm101, %v41, 0
    %v112 = vsel %vm101, %v42, 0
    %v115 = vsel %vm101, %v43, 0
    %v118 = vsel %vm101, %v44, 0
    %v121 = vsel %vm101, %v45, 0
    %v124 = vsel %vm101, %v46, 0
    %vm126 = vcmask 1045504
    %v128 = vsel %vm126, %v96, 0
    %v131 = vsel %vm126, %v97, 0
    %v134 = vsel %vm126, %v98, 0
    %v137 = vsel %vm126, %v99, 0
    %v140 = vsel %vm126, %v100, 0
    %142 = vmatprep.subr.bf16.mxu0 0
    %143 = vmatpush1.bf16.msra.mxu0 0
    %144 = vmatprep.subr.bf16.mxu0 0
    %145 = vmatpush1.bf16.msra.mxu0 0
    %146 = vmatprep.subr.bf16.mxu0 0
    %147 = vmatpush1.bf16.msra.mxu0 0
    %148 = vmatprep.subr.bf16.mxu0 0
    %149 = vmatpush1.bf16.msra.mxu0 0
    %150 = vmatprep.subr.bf16.mxu0 0
    %151 = vmatpush1.bf16.msra.mxu0 0
    %152 = vmatprep.subr.bf16.mxu0 0
    %153 = vmatpush1.bf16.msra.mxu0 0
    %154 = vmatprep.subr.bf16.mxu0 0
    %155 = vmatpush1.bf16.msra.mxu0 0
    %156 = vmatprep.subr.bf16.mxu0 %v131
    %157 = vmatpush1.bf16.msra.mxu0 %v128
    %158 = vmatprep.subr.bf16.mxu0 0
    %159 = vmatpush2.bf16.msra.mxu0 0
    %160 = vmatprep.subr.bf16.mxu0 0
    %161 = vmatpush2.bf16.msra.mxu0 0
    %162 = vmatprep.subr.bf16.mxu0 0
    %163 = vmatpush2.bf16.msra.mxu0 0
    %164 = vmatprep.subr.bf16.mxu0 0
    %165 = vmatpush2.bf16.msra.mxu0 0
    %166 = vmatprep.subr.bf16.mxu0 0
    %167 = vmatpush2.bf16.msra.mxu0 0
    %168 = vmatprep.subr.bf16.mxu0 0
    %169 = vmatpush2.bf16.msra.mxu0 0
    %170 = vmatprep.subr.bf16.mxu0 0
    %171 = vmatpush2.bf16.msra.mxu0 0
    %172 = vmatprep.subr.bf16.mxu0 0
    %173 = vmatpush2.bf16.msra.mxu0 0
    %174 = vmatprep.mubr.bf16.mxu0 0
    %175 = vmatmul.mubr.bf16.gmra.mxu0 %v103
    %v176 = vpop.f32.mrf.mxu0
    %v177 = vadd.f32 %v58, %v176
    %v178 = vpop.f32.mrf.mxu0
    %v179 = vadd.f32 %v62, %v178
    %v180 = vpop.f32.mrf.mxu0
    %v181 = vadd.f32 %v58, %v180
    %v182 = vpop.f32.mrf.mxu0
    %v183 = vadd.f32 %v62, %v182
    %184 = vmatprep.mubr.bf16.mxu0 0
    %185 = vmatmul.mubr.bf16.gmra.mxu0 %v106
    %v186 = vpop.f32.mrf.mxu0
    %v187 = vadd.f32 %v58, %v186
    %v188 = vpop.f32.mrf.mxu0
    %v189 = vadd.f32 %v62, %v188
    %v190 = vpop.f32.mrf.mxu0
    %v191 = vadd.f32 %v58, %v190
    %v192 = vpop.f32.mrf.mxu0
    %v193 = vadd.f32 %v62, %v192
    %194 = vmatprep.mubr.bf16.mxu0 0
    %195 = vmatmul.mubr.bf16.gmra.mxu0 %v109
    %v196 = vpop.f32.mrf.mxu0
    %v197 = vadd.f32 %v58, %v196
    %v198 = vpop.f32.mrf.mxu0
    %v199 = vadd.f32 %v62, %v198
    %v200 = vpop.f32.mrf.mxu0
    %v201 = vadd.f32 %v58, %v200
    %v202 = vpop.f32.mrf.mxu0
    %v203 = vadd.f32 %v62, %v202
    %204 = vmatprep.mubr.bf16.mxu0 0
    %205 = vmatmul.mubr.bf16.gmra.mxu0 %v112
    %v206 = vpop.f32.mrf.mxu0
    %v207 = vadd.f32 %v58, %v206
    %v208 = vpop.f32.mrf.mxu0
    %v209 = vadd.f32 %v62, %v208
    %v210 = vpop.f32.mrf.mxu0
    %v211 = vadd.f32 %v58, %v210
    %v212 = vpop.f32.mrf.mxu0
    %v213 = vadd.f32 %v62, %v212
    %214 = vmatprep.mubr.bf16.mxu0 0
    %215 = vmatmul.mubr.bf16.gmra.mxu0 %v115
    %v216 = vpop.f32.mrf.mxu0
    %v217 = vadd.f32 %v58, %v216
    %v218 = vpop.f32.mrf.mxu0
    %v219 = vadd.f32 %v62, %v218
    %v220 = vpop.f32.mrf.mxu0
    %v221 = vadd.f32 %v58, %v220
    %v222 = vpop.f32.mrf.mxu0
    %v223 = vadd.f32 %v62, %v222
    %224 = vmatprep.mubr.bf16.mxu0 0
    %225 = vmatmul.mubr.bf16.gmra.mxu0 %v118
    %v226 = vpop.f32.mrf.mxu0
    %v227 = vadd.f32 %v58, %v226
    %v228 = vpop.f32.mrf.mxu0
    %v229 = vadd.f32 %v62, %v228
    %v230 = vpop.f32.mrf.mxu0
    %v231 = vadd.f32 %v58, %v230
    %v232 = vpop.f32.mrf.mxu0
    %v233 = vadd.f32 %v62, %v232
    %234 = vmatprep.mubr.bf16.mxu0 0
    %235 = vmatmul.mubr.bf16.gmra.mxu0 %v121
    %v236 = vpop.f32.mrf.mxu0
    %v237 = vadd.f32 %v58, %v236
    %v238 = vpop.f32.mrf.mxu0
    %v239 = vadd.f32 %v62, %v238
    %v240 = vpop.f32.mrf.mxu0
    %v241 = vadd.f32 %v58, %v240
    %v242 = vpop.f32.mrf.mxu0
    %v243 = vadd.f32 %v62, %v242
    %244 = vmatprep.mubr.bf16.mxu0 0
    %245 = vmatmul.mubr.bf16.gmra.mxu0 %v124
    %v246 = vpop.f32.mrf.mxu0
    %v247 = vadd.f32 %v58, %v246
    %v248 = vpop.f32.mrf.mxu0
    %v249 = vadd.f32 %v62, %v248
    %v250 = vpop.f32.mrf.mxu0
    %v251 = vadd.f32 %v58, %v250
    %v252 = vpop.f32.mrf.mxu0
    %v253 = vadd.f32 %v62, %v252
    %254 = vdwg.mxu0
    %255 = vmatprep.subr.bf16.mxu0 0
    %256 = vmatpush1.bf16.msra.mxu0 0
    %257 = vmatprep.subr.bf16.mxu0 0
    %258 = vmatpush1.bf16.msra.mxu0 0
    %259 = vmatprep.subr.bf16.mxu0 0
    %260 = vmatpush1.bf16.msra.mxu0 0
    %261 = vmatprep.subr.bf16.mxu0 0
    %262 = vmatpush1.bf16.msra.mxu0 0
    %263 = vmatprep.subr.bf16.mxu0 0
    %264 = vmatpush1.bf16.msra.mxu0 0
    %265 = vmatprep.subr.bf16.mxu0 0
    %266 = vmatpush1.bf16.msra.mxu0 0
    %267 = vmatprep.subr.bf16.mxu0 0
    %268 = vmatpush1.bf16.msra.mxu0 0
    %269 = vmatprep.subr.bf16.mxu0 %v137
    %270 = vmatpush1.bf16.msra.mxu0 %v134
    %271 = vmatprep.subr.bf16.mxu0 0
    %272 = vmatpush2.bf16.msra.mxu0 0
    %273 = vmatprep.subr.bf16.mxu0 0
    %274 = vmatpush2.bf16.msra.mxu0 0
    %275 = vmatprep.subr.bf16.mxu0 0
    %276 = vmatpush2.bf16.msra.mxu0 0
    %277 = vmatprep.subr.bf16.mxu0 0
    %278 = vmatpush2.bf16.msra.mxu0 0
    %279 = vmatprep.subr.bf16.mxu0 0
    %280 = vmatpush2.bf16.msra.mxu0 0
    %281 = vmatprep.subr.bf16.mxu0 0
    %282 = vmatpush2.bf16.msra.mxu0 0
    %283 = vmatprep.subr.bf16.mxu0 0
    %284 = vmatpush2.bf16.msra.mxu0 0
    %285 = vmatprep.subr.bf16.mxu0 0
    %286 = vmatpush2.bf16.msra.mxu0 0
    %287 = vmatprep.mubr.bf16.mxu0 0
    %288 = vmatmul.mubr.bf16.gmra.mxu0 %v103
    %v289 = vpop.f32.mrf.mxu0
    %v290 = vadd.f32 %v66, %v289
    %v291 = vpop.f32.mrf.mxu0
    %v292 = vadd.f32 %v70, %v291
    %v293 = vpop.f32.mrf.mxu0
    %v294 = vadd.f32 %v66, %v293
    %v295 = vpop.f32.mrf.mxu0
    %v296 = vadd.f32 %v70, %v295
    %297 = vmatprep.mubr.bf16.mxu0 0
    %298 = vmatmul.mubr.bf16.gmra.mxu0 %v106
    %v299 = vpop.f32.mrf.mxu0
    %v300 = vadd.f32 %v66, %v299
    %v301 = vpop.f32.mrf.mxu0
    %v302 = vadd.f32 %v70, %v301
    %v303 = vpop.f32.mrf.mxu0
    %v304 = vadd.f32 %v66, %v303
    %v305 = vpop.f32.mrf.mxu0
    %v306 = vadd.f32 %v70, %v305
    %307 = vmatprep.mubr.bf16.mxu0 0
    %308 = vmatmul.mubr.bf16.gmra.mxu0 %v109
    %v309 = vpop.f32.mrf.mxu0
    %v310 = vadd.f32 %v66, %v309
    %v311 = vpop.f32.mrf.mxu0
    %v312 = vadd.f32 %v70, %v311
    %v313 = vpop.f32.mrf.mxu0
    %v314 = vadd.f32 %v66, %v313
    %v315 = vpop.f32.mrf.mxu0
    %v316 = vadd.f32 %v70, %v315
    %317 = vmatprep.mubr.bf16.mxu0 0
    %318 = vmatmul.mubr.bf16.gmra.mxu0 %v112
    %v319 = vpop.f32.mrf.mxu0
    %v320 = vadd.f32 %v66, %v319
    %v321 = vpop.f32.mrf.mxu0
    %v322 = vadd.f32 %v70, %v321
    %v323 = vpop.f32.mrf.mxu0
    %v324 = vadd.f32 %v66, %v323
    %v325 = vpop.f32.mrf.mxu0
    %v326 = vadd.f32 %v70, %v325
    %327 = vmatprep.mubr.bf16.mxu0 0
    %328 = vmatmul.mubr.bf16.gmra.mxu0 %v115
    %v329 = vpop.f32.mrf.mxu0
    %v330 = vadd.f32 %v66, %v329
    %v331 = vpop.f32.mrf.mxu0
    %v332 = vadd.f32 %v70, %v331
    %v333 = vpop.f32.mrf.mxu0
    %v334 = vadd.f32 %v66, %v333
    %v335 = vpop.f32.mrf.mxu0
    %v336 = vadd.f32 %v70, %v335
    %337 = vmatprep.mubr.bf16.mxu0 0
    %338 = vmatmul.mubr.bf16.gmra.mxu0 %v118
    %v339 = vpop.f32.mrf.mxu0
    %v340 = vadd.f32 %v66, %v339
    %v341 = vpop.f32.mrf.mxu0
    %v342 = vadd.f32 %v70, %v341
    %v343 = vpop.f32.mrf.mxu0
    %v344 = vadd.f32 %v66, %v343
    %v345 = vpop.f32.mrf.mxu0
    %v346 = vadd.f32 %v70, %v345
    %347 = vmatprep.mubr.bf16.mxu0 0
    %348 = vmatmul.mubr.bf16.gmra.mxu0 %v121
    %v349 = vpop.f32.mrf.mxu0
    %v350 = vadd.f32 %v66, %v349
    %v351 = vpop.f32.mrf.mxu0
    %v352 = vadd.f32 %v70, %v351
    %v353 = vpop.f32.mrf.mxu0
    %v354 = vadd.f32 %v66, %v353
    %v355 = vpop.f32.mrf.mxu0
    %v356 = vadd.f32 %v70, %v355
    %357 = vmatprep.mubr.bf16.mxu0 0
    %358 = vmatmul.mubr.bf16.gmra.mxu0 %v124
    %v359 = vpop.f32.mrf.mxu0
    %v360 = vadd.f32 %v66, %v359
    %v361 = vpop.f32.mrf.mxu0
    %v362 = vadd.f32 %v70, %v361
    %v363 = vpop.f32.mrf.mxu0
    %v364 = vadd.f32 %v66, %v363
    %v365 = vpop.f32.mrf.mxu0
    %v366 = vadd.f32 %v70, %v365
    %367 = vdwg.mxu0
    %368 = vmatprep.subr.bf16.mxu0 0
    %369 = vmatpush1.bf16.msra.mxu0 0
    %370 = vmatprep.subr.bf16.mxu0 0
    %371 = vmatpush1.bf16.msra.mxu0 0
    %372 = vmatprep.subr.bf16.mxu0 0
    %373 = vmatpush1.bf16.msra.mxu0 0
    %374 = vmatprep.subr.bf16.mxu0 0
    %375 = vmatpush1.bf16.msra.mxu0 0
    %376 = vmatprep.subr.bf16.mxu0 0
    %377 = vmatpush1.bf16.msra.mxu0 0
    %378 = vmatprep.subr.bf16.mxu0 0
    %379 = vmatpush1.bf16.msra.mxu0 0
    %380 = vmatprep.subr.bf16.mxu0 0
    %381 = vmatpush1.bf16.msra.mxu0 0
    %382 = vmatprep.subr.bf16.mxu0 0
    %383 = vmatpush1.bf16.msra.mxu0 %v140
    %384 = vmatprep.subr.bf16.mxu0 0
    %385 = vmatpush2.bf16.msra.mxu0 0
    %386 = vmatprep.subr.bf16.mxu0 0
    %387 = vmatpush2.bf16.msra.mxu0 0
    %388 = vmatprep.subr.bf16.mxu0 0
    %389 = vmatpush2.bf16.msra.mxu0 0
    %390 = vmatprep.subr.bf16.mxu0 0
    %391 = vmatpush2.bf16.msra.mxu0 0
    %392 = vmatprep.subr.bf16.mxu0 0
    %393 = vmatpush2.bf16.msra.mxu0 0
    %394 = vmatprep.subr.bf16.mxu0 0
    %395 = vmatpush2.bf16.msra.mxu0 0
    %396 = vmatprep.subr.bf16.mxu0 0
    %397 = vmatpush2.bf16.msra.mxu0 0
    %398 = vmatprep.subr.bf16.mxu0 0
    %399 = vmatpush2.bf16.msra.mxu0 0
    %400 = vmatprep.mubr.bf16.mxu0 0
    %401 = vmatmul.mubr.bf16.gmra.mxu0 %v103
    %v402 = vpop.f32.mrf.mxu0
    %v403 = vadd.f32 %v74, %v402
    %v404 = vpop.f32.mrf.mxu0
    %v405 = vpop.f32.mrf.mxu0
    %v406 = vadd.f32 %v74, %v405
    %v407 = vpop.f32.mrf.mxu0
    %408 = vmatprep.mubr.bf16.mxu0 0
    %409 = vmatmul.mubr.bf16.gmra.mxu0 %v106
    %v410 = vpop.f32.mrf.mxu0
    %v411 = vadd.f32 %v74, %v410
    %v412 = vpop.f32.mrf.mxu0
    %v413 = vpop.f32.mrf.mxu0
    %v414 = vadd.f32 %v74, %v413
    %v415 = vpop.f32.mrf.mxu0
    %416 = vmatprep.mubr.bf16.mxu0 0
    %417 = vmatmul.mubr.bf16.gmra.mxu0 %v109
    %v418 = vpop.f32.mrf.mxu0
    %v419 = vadd.f32 %v74, %v418
    %v420 = vpop.f32.mrf.mxu0
    %v421 = vpop.f32.mrf.mxu0
    %v422 = vadd.f32 %v74, %v421
    %v423 = vpop.f32.mrf.mxu0
    %424 = vmatprep.mubr.bf16.mxu0 0
    %425 = vmatmul.mubr.bf16.gmra.mxu0 %v112
    %v426 = vpop.f32.mrf.mxu0
    %v427 = vadd.f32 %v74, %v426
    %v428 = vpop.f32.mrf.mxu0
    %v429 = vpop.f32.mrf.mxu0
    %v430 = vadd.f32 %v74, %v429
    %v431 = vpop.f32.mrf.mxu0
    %432 = vmatprep.mubr.bf16.mxu0 0
    %433 = vmatmul.mubr.bf16.gmra.mxu0 %v115
    %v434 = vpop.f32.mrf.mxu0
    %v435 = vadd.f32 %v74, %v434
    %v436 = vpop.f32.mrf.mxu0
    %v437 = vpop.f32.mrf.mxu0
    %v438 = vadd.f32 %v74, %v437
    %v439 = vpop.f32.mrf.mxu0
    %440 = vmatprep.mubr.bf16.mxu0 0
    %441 = vmatmul.mubr.bf16.gmra.mxu0 %v118
    %v442 = vpop.f32.mrf.mxu0
    %v443 = vadd.f32 %v74, %v442
    %v444 = vpop.f32.mrf.mxu0
    %v445 = vpop.f32.mrf.mxu0
    %v446 = vadd.f32 %v74, %v445
    %v447 = vpop.f32.mrf.mxu0
    %448 = vmatprep.mubr.bf16.mxu0 0
    %449 = vmatmul.mubr.bf16.gmra.mxu0 %v121
    %v450 = vpop.f32.mrf.mxu0
    %v451 = vadd.f32 %v74, %v450
    %v452 = vpop.f32.mrf.mxu0
    %v453 = vpop.f32.mrf.mxu0
    %v454 = vadd.f32 %v74, %v453
    %v455 = vpop.f32.mrf.mxu0
    %456 = vmatprep.mubr.bf16.mxu0 0
    %457 = vmatmul.mubr.bf16.gmra.mxu0 %v124
    %v458 = vpop.f32.mrf.mxu0
    %v459 = vadd.f32 %v74, %v458
    %v460 = vpop.f32.mrf.mxu0
    %v461 = vpop.f32.mrf.mxu0
    %v462 = vadd.f32 %v74, %v461
    %v463 = vpop.f32.mrf.mxu0
    %464 = vdwg.mxu0
    %v465 = vpack.c.bf16 %v181, %v177
    %v466 = vpack.c.bf16 %v183, %v179
    %v467 = vpack.c.bf16 %v294, %v290
    %v468 = vpack.c.bf16 %v296, %v292
    %v469 = vpack.c.bf16 %v406, %v403
    %v470 = vpack.c.bf16 %v191, %v187
    %v471 = vpack.c.bf16 %v193, %v189
    %v472 = vpack.c.bf16 %v304, %v300
    %v473 = vpack.c.bf16 %v306, %v302
    %v474 = vpack.c.bf16 %v414, %v411
    %v475 = vpack.c.bf16 %v201, %v197
    %v476 = vpack.c.bf16 %v203, %v199
    %v477 = vpack.c.bf16 %v314, %v310
    %v478 = vpack.c.bf16 %v316, %v312
    %v479 = vpack.c.bf16 %v422, %v419
    %v480 = vpack.c.bf16 %v211, %v207
    %v481 = vpack.c.bf16 %v213, %v209
    %v482 = vpack.c.bf16 %v324, %v320
    %v483 = vpack.c.bf16 %v326, %v322
    %v484 = vpack.c.bf16 %v430, %v427
    %v485 = vpack.c.bf16 %v221, %v217
    %v486 = vpack.c.bf16 %v223, %v219
    %v487 = vpack.c.bf16 %v334, %v330
    %v488 = vpack.c.bf16 %v336, %v332
    %v489 = vpack.c.bf16 %v438, %v435
    %v490 = vpack.c.bf16 %v231, %v227
    %v491 = vpack.c.bf16 %v233, %v229
    %v492 = vpack.c.bf16 %v344, %v340
    %v493 = vpack.c.bf16 %v346, %v342
    %v494 = vpack.c.bf16 %v446, %v443
    %v495 = vpack.c.bf16 %v241, %v237
    %v496 = vpack.c.bf16 %v243, %v239
    %v497 = vpack.c.bf16 %v354, %v350
    %v498 = vpack.c.bf16 %v356, %v352
    %v499 = vpack.c.bf16 %v454, %v451
    %v500 = vpack.c.bf16 %v251, %v247
    %v501 = vpack.c.bf16 %v253, %v249
    %v502 = vpack.c.bf16 %v364, %v360
    %v503 = vpack.c.bf16 %v366, %v362
    %v504 = vpack.c.bf16 %v462, %v459
    %v505 = vtanh.bf16.pop %v465
    %v506 = vtanh.bf16.pop %v466
    %v507 = vtanh.bf16.pop %v467
    %v508 = vtanh.bf16.pop %v468
    %v509 = vtanh.bf16.pop %v469
    %v510 = vtanh.bf16.pop %v470
    %v511 = vtanh.bf16.pop %v471
    %v512 = vtanh.bf16.pop %v472
    %v513 = vtanh.bf16.pop %v473
    %v514 = vtanh.bf16.pop %v474
    %v515 = vtanh.bf16.pop %v475
    %v516 = vtanh.bf16.pop %v476
    %v517 = vtanh.bf16.pop %v477
    %v518 = vtanh.bf16.pop %v478
    %v519 = vtanh.bf16.pop %v479
    %v520 = vtanh.bf16.pop %v480
    %v521 = vtanh.bf16.pop %v481
    %v522 = vtanh.bf16.pop %v482
    %v523 = vtanh.bf16.pop %v483
    %v524 = vtanh.bf16.pop %v484
    %v525 = vtanh.bf16.pop %v485
    %v526 = vtanh.bf16.pop %v486
    %v527 = vtanh.bf16.pop %v487
    %v528 = vtanh.bf16.pop %v488
    %v529 = vtanh.bf16.pop %v489
    %v530 = vtanh.bf16.pop %v490
    %v531 = vtanh.bf16.pop %v491
    %v532 = vtanh.bf16.pop %v492
    %v533 = vtanh.bf16.pop %v493
    %v534 = vtanh.bf16.pop %v494
    %v535 = vtanh.bf16.pop %v495
    %v536 = vtanh.bf16.pop %v496
    %v537 = vtanh.bf16.pop %v497
    %v538 = vtanh.bf16.pop %v498
    %v539 = vtanh.bf16.pop %v499
    %v540 = vtanh.bf16.pop %v500
    %v541 = vtanh.bf16.pop %v501
    %v542 = vtanh.bf16.pop %v502
    %v543 = vtanh.bf16.pop %v503
    %v544 = vtanh.bf16.pop %v504
    %v545 = vld [vmem:[%s3] sm:$0x1f]
    %v547 = vcombine.high %v545, %v545
    %v549 = vunpack.c.l.s4 1966171168
    %v550 = vunpack.c.0.s8 %v549
    %v551 = vlaneseq
    %v552 = vshrl.u32 %v551, 7
    %v553 = vsub.s32 %v550, %v552
    %v554 = vrot.slane %v545, %v553
    %v556 = vunpack.c.l.s4 1966171168
    %v557 = vunpack.c.0.s8 %v556
    %v558 = vlaneseq
    %v559 = vshrl.u32 %v558, 7
    %v560 = vsub.s32 %v557, %v559
    %v561 = vrot.slane %v547, %v560
    %v562 = vcombine.high %v554, %v554
    %v564 = vunpack.c.l.s4 1966171168
    %v565 = vunpack.c.0.s8 %v564
    %v566 = vlaneseq
    %v567 = vshrl.u32 %v566, 7
    %v568 = vsub.s32 %v565, %v567
    %v569 = vrot.slane %v554, %v568
    %v571 = vunpack.c.l.s4 1966171168
    %v572 = vunpack.c.0.s8 %v571
    %v573 = vlaneseq
    %v574 = vshrl.u32 %v573, 7
    %v575 = vsub.s32 %v572, %v574
    %v576 = vrot.slane %v561, %v575
    %v578 = vunpack.c.l.s4 1966171168
    %v579 = vunpack.c.0.s8 %v578
    %v580 = vlaneseq
    %v581 = vshrl.u32 %v580, 7
    %v582 = vsub.s32 %v579, %v581
    %v583 = vrot.slane %v562, %v582
    %v584 = vcombine.high %v569, %v569
    %v585 = vcombine.high %v583, %v583
    %v587 = vpack.i.b16 %v569, %v569
    %v589 = vlaneseq
    %v590 = vshrl.u32 %v589, 7
    %v591 = vsub.s32 0, %v590
    %v592 = vrot.slane %v587, %v591
    %v594 = vpack.i.b16 %v583, %v583
    %v596 = vlaneseq
    %v597 = vshrl.u32 %v596, 7
    %v598 = vsub.s32 0, %v597
    %v599 = vrot.slane %v594, %v598
    %v601 = vpack.i.b16 %v584, %v584
    %v603 = vlaneseq
    %v604 = vshrl.u32 %v603, 7
    %v605 = vsub.s32 0, %v604
    %v606 = vrot.slane %v601, %v605
    %v608 = vpack.i.b16 %v585, %v585
    %v610 = vlaneseq
    %v611 = vshrl.u32 %v610, 7
    %v612 = vsub.s32 0, %v611
    %v613 = vrot.slane %v608, %v612
    %v615 = vpack.i.b16 %v576, %v576
    %v617 = vlaneseq
    %v618 = vshrl.u32 %v617, 7
    %v619 = vsub.s32 0, %v618
    %v620 = vrot.slane %v615, %v619
    %v621 = vmul.bf16 %v505, %v592
    %v622 = vmul.bf16 %v506, %v599
    %v623 = vmul.bf16 %v507, %v606
    %v624 = vmul.bf16 %v508, %v613
    %v625 = vmul.bf16 %v509, %v620
    %v626 = vmul.bf16 %v510, %v592
    %v627 = vmul.bf16 %v511, %v599
    %v628 = vmul.bf16 %v512, %v606
    %v629 = vmul.bf16 %v513, %v613
    %v630 = vmul.bf16 %v514, %v620
    %v631 = vmul.bf16 %v515, %v592
    %v632 = vmul.bf16 %v516, %v599
    %v633 = vmul.bf16 %v517, %v606
    %v634 = vmul.bf16 %v518, %v613
    %v635 = vmul.bf16 %v519, %v620
    %v636 = vmul.bf16 %v520, %v592
    %v637 = vmul.bf16 %v521, %v599
    %v638 = vmul.bf16 %v522, %v606
    %v639 = vmul.bf16 %v523, %v613
    %v640 = vmul.bf16 %v524, %v620
    %v641 = vmul.bf16 %v525, %v592
    %v642 = vmul.bf16 %v526, %v599
    %v643 = vmul.bf16 %v527, %v606
    %v644 = vmul.bf16 %v528, %v613
    %v645 = vmul.bf16 %v529, %v620
    %v646 = vmul.bf16 %v530, %v592
    %v647 = vmul.bf16 %v531, %v599
    %v648 = vmul.bf16 %v532, %v606
    %v649 = vmul.bf16 %v533, %v613
    %v650 = vmul.bf16 %v534, %v620
    %v651 = vmul.bf16 %v535, %v592
    %v652 = vmul.bf16 %v536, %v599
    %v653 = vmul.bf16 %v537, %v606
    %v654 = vmul.bf16 %v538, %v613
    %v655 = vmul.bf16 %v539, %v620
    %v656 = vmul.bf16 %v540, %v592
    %v657 = vmul.bf16 %v541, %v599
    %v658 = vmul.bf16 %v542, %v606
    %v659 = vmul.bf16 %v543, %v613
    %v660 = vmul.bf16 %v544, %v620
    %v661 = vunpack.c.l.bf16 %v621
    %v662 = vunpack.c.l.bf16 %v622
    %v663 = vunpack.c.l.bf16 %v623
    %v664 = vunpack.c.l.bf16 %v624
    %v665 = vunpack.c.l.bf16 %v625
    %v666 = vunpack.c.h.bf16 %v621
    %v667 = vunpack.c.h.bf16 %v622
    %v668 = vunpack.c.h.bf16 %v623
    %v669 = vunpack.c.h.bf16 %v624
    %v670 = vunpack.c.h.bf16 %v625
    %v671 = vunpack.c.l.bf16 %v626
    %v672 = vunpack.c.l.bf16 %v627
    %v673 = vunpack.c.l.bf16 %v628
    %v674 = vunpack.c.l.bf16 %v629
    %v675 = vunpack.c.l.bf16 %v630
    %v676 = vunpack.c.h.bf16 %v626
    %v677 = vunpack.c.h.bf16 %v627
    %v678 = vunpack.c.h.bf16 %v628
    %v679 = vunpack.c.h.bf16 %v629
    %v680 = vunpack.c.h.bf16 %v630
    %v681 = vunpack.c.l.bf16 %v631
    %v682 = vunpack.c.l.bf16 %v632
    %v683 = vunpack.c.l.bf16 %v633
    %v684 = vunpack.c.l.bf16 %v634
    %v685 = vunpack.c.l.bf16 %v635
    %v686 = vunpack.c.h.bf16 %v631
    %v687 = vunpack.c.h.bf16 %v632
    %v688 = vunpack.c.h.bf16 %v633
    %v689 = vunpack.c.h.bf16 %v634
    %v690 = vunpack.c.h.bf16 %v635
    %v691 = vunpack.c.l.bf16 %v636
    %v692 = vunpack.c.l.bf16 %v637
    %v693 = vunpack.c.l.bf16 %v638
    %v694 = vunpack.c.l.bf16 %v639
    %v695 = vunpack.c.l.bf16 %v640
    %v696 = vunpack.c.h.bf16 %v636
    %v697 = vunpack.c.h.bf16 %v637
    %v698 = vunpack.c.h.bf16 %v638
    %v699 = vunpack.c.h.bf16 %v639
    %v700 = vunpack.c.h.bf16 %v640
    %v701 = vunpack.c.l.bf16 %v641
    %v702 = vunpack.c.l.bf16 %v642
    %v703 = vunpack.c.l.bf16 %v643
    %v704 = vunpack.c.l.bf16 %v644
    %v705 = vunpack.c.l.bf16 %v645
    %v706 = vunpack.c.h.bf16 %v641
    %v707 = vunpack.c.h.bf16 %v642
    %v708 = vunpack.c.h.bf16 %v643
    %v709 = vunpack.c.h.bf16 %v644
    %v710 = vunpack.c.h.bf16 %v645
    %v711 = vunpack.c.l.bf16 %v646
    %v712 = vunpack.c.l.bf16 %v647
    %v713 = vunpack.c.l.bf16 %v648
    %v714 = vunpack.c.l.bf16 %v649
    %v715 = vunpack.c.l.bf16 %v650
    %v716 = vunpack.c.h.bf16 %v646
    %v717 = vunpack.c.h.bf16 %v647
    %v718 = vunpack.c.h.bf16 %v648
    %v719 = vunpack.c.h.bf16 %v649
    %v720 = vunpack.c.h.bf16 %v650
    %v721 = vunpack.c.l.bf16 %v651
    %v722 = vunpack.c.l.bf16 %v652
    %v723 = vunpack.c.l.bf16 %v653
    %v724 = vunpack.c.l.bf16 %v654
    %v725 = vunpack.c.l.bf16 %v655
    %v726 = vunpack.c.h.bf16 %v651
    %v727 = vunpack.c.h.bf16 %v652
    %v728 = vunpack.c.h.bf16 %v653
    %v729 = vunpack.c.h.bf16 %v654
    %v730 = vunpack.c.h.bf16 %v655
    %v731 = vunpack.c.l.bf16 %v656
    %v732 = vunpack.c.l.bf16 %v657
    %v733 = vunpack.c.l.bf16 %v658
    %v734 = vunpack.c.l.bf16 %v659
    %v735 = vunpack.c.l.bf16 %v660
    %v736 = vunpack.c.h.bf16 %v656
    %v737 = vunpack.c.h.bf16 %v657
    %v738 = vunpack.c.h.bf16 %v658
    %v739 = vunpack.c.h.bf16 %v659
    %v740 = vunpack.c.h.bf16 %v660
    %v741 = vadd.f32 %v661, %v662
    %v742 = vadd.f32 %v741, %v663
    %v743 = vadd.f32 %v742, %v664
    %v744 = vadd.f32 %v743, %v665
    %745 = vadd.xlane.f32.xlu0 %v744
    %v746 = vpop.xlane.xlu0 %745
    %v747 = vadd.f32 %v666, %v667
    %v748 = vadd.f32 %v747, %v668
    %v749 = vadd.f32 %v748, %v669
    %v750 = vadd.f32 %v749, %v670
    %751 = vadd.xlane.f32.xlu0 %v750
    %v752 = vpop.xlane.xlu0 %751
    %v753 = vadd.f32 %v671, %v672
    %v754 = vadd.f32 %v753, %v673
    %v755 = vadd.f32 %v754, %v674
    %v756 = vadd.f32 %v755, %v675
    %757 = vadd.xlane.f32.xlu0 %v756
    %v758 = vpop.xlane.xlu0 %757
    %v759 = vadd.f32 %v676, %v677
    %v760 = vadd.f32 %v759, %v678
    %v761 = vadd.f32 %v760, %v679
    %v762 = vadd.f32 %v761, %v680
    %763 = vadd.xlane.f32.xlu0 %v762
    %v764 = vpop.xlane.xlu0 %763
    %v765 = vadd.f32 %v681, %v682
    %v766 = vadd.f32 %v765, %v683
    %v767 = vadd.f32 %v766, %v684
    %v768 = vadd.f32 %v767, %v685
    %769 = vadd.xlane.f32.xlu0 %v768
    %v770 = vpop.xlane.xlu0 %769
    %v771 = vadd.f32 %v686, %v687
    %v772 = vadd.f32 %v771, %v688
    %v773 = vadd.f32 %v772, %v689
    %v774 = vadd.f32 %v773, %v690
    %775 = vadd.xlane.f32.xlu0 %v774
    %v776 = vpop.xlane.xlu0 %775
    %v777 = vadd.f32 %v691, %v692
    %v778 = vadd.f32 %v777, %v693
    %v779 = vadd.f32 %v778, %v694
    %v780 = vadd.f32 %v779, %v695
    %781 = vadd.xlane.f32.xlu0 %v780
    %v782 = vpop.xlane.xlu0 %781
    %v783 = vadd.f32 %v696, %v697
    %v784 = vadd.f32 %v783, %v698
    %v785 = vadd.f32 %v784, %v699
    %v786 = vadd.f32 %v785, %v700
    %787 = vadd.xlane.f32.xlu0 %v786
    %v788 = vpop.xlane.xlu0 %787
    %v789 = vadd.f32 %v701, %v702
    %v790 = vadd.f32 %v789, %v703
    %v791 = vadd.f32 %v790, %v704
    %v792 = vadd.f32 %v791, %v705
    %793 = vadd.xlane.f32.xlu0 %v792
    %v794 = vpop.xlane.xlu0 %793
    %v795 = vadd.f32 %v706, %v707
    %v796 = vadd.f32 %v795, %v708
    %v797 = vadd.f32 %v796, %v709
    %v798 = vadd.f32 %v797, %v710
    %799 = vadd.xlane.f32.xlu0 %v798
    %v800 = vpop.xlane.xlu0 %799
    %v801 = vadd.f32 %v711, %v712
    %v802 = vadd.f32 %v801, %v713
    %v803 = vadd.f32 %v802, %v714
    %v804 = vadd.f32 %v803, %v715
    %805 = vadd.xlane.f32.xlu0 %v804
    %v806 = vpop.xlane.xlu0 %805
    %v807 = vadd.f32 %v716, %v717
    %v808 = vadd.f32 %v807, %v718
    %v809 = vadd.f32 %v808, %v719
    %v810 = vadd.f32 %v809, %v720
    %811 = vadd.xlane.f32.xlu0 %v810
    %v812 = vpop.xlane.xlu0 %811
    %v813 = vadd.f32 %v721, %v722
    %v814 = vadd.f32 %v813, %v723
    %v815 = vadd.f32 %v814, %v724
    %v816 = vadd.f32 %v815, %v725
    %817 = vadd.xlane.f32.xlu0 %v816
    %v818 = vpop.xlane.xlu0 %817
    %v819 = vadd.f32 %v726, %v727
    %v820 = vadd.f32 %v819, %v728
    %v821 = vadd.f32 %v820, %v729
    %v822 = vadd.f32 %v821, %v730
    %823 = vadd.xlane.f32.xlu0 %v822
    %v824 = vpop.xlane.xlu0 %823
    %v825 = vadd.f32 %v731, %v732
    %v826 = vadd.f32 %v825, %v733
    %v827 = vadd.f32 %v826, %v734
    %v828 = vadd.f32 %v827, %v735
    %829 = vadd.xlane.f32.xlu0 %v828
    %v830 = vpop.xlane.xlu0 %829
    %v831 = vadd.f32 %v736, %v737
    %v832 = vadd.f32 %v831, %v738
    %v833 = vadd.f32 %v832, %v739
    %v834 = vadd.f32 %v833, %v740
    %835 = vadd.xlane.f32.xlu0 %v834
    %v836 = vpop.xlane.xlu0 %835
    %s837 = sld [smem:[#allocation2]]
    %v838 = vstv %s837
    %v839 = vadd.f32 %v746, %v838
    %v840 = vadd.f32 %v752, %v838
    %v841 = vadd.f32 %v758, %v838
    %v842 = vadd.f32 %v764, %v838
    %v843 = vadd.f32 %v770, %v838
    %v844 = vadd.f32 %v776, %v838
    %v845 = vadd.f32 %v782, %v838
    %v846 = vadd.f32 %v788, %v838
    %v847 = vadd.f32 %v794, %v838
    %v848 = vadd.f32 %v800, %v838
    %v849 = vadd.f32 %v806, %v838
    %v850 = vadd.f32 %v812, %v838
    %v851 = vadd.f32 %v818, %v838
    %v852 = vadd.f32 %v824, %v838
    %v853 = vadd.f32 %v830, %v838
    %v854 = vadd.f32 %v836, %v838
    %v855 = vxor.u32 %v839, 2147483648
    %v856 = vxor.u32 %v840, 2147483648
    %v857 = vxor.u32 %v841, 2147483648
    %v858 = vxor.u32 %v842, 2147483648
    %v859 = vxor.u32 %v843, 2147483648
    %v860 = vxor.u32 %v844, 2147483648
    %v861 = vxor.u32 %v845, 2147483648
    %v862 = vxor.u32 %v846, 2147483648
    %v863 = vxor.u32 %v847, 2147483648
    %v864 = vxor.u32 %v848, 2147483648
    %v865 = vxor.u32 %v849, 2147483648
    %v866 = vxor.u32 %v850, 2147483648
    %v867 = vxor.u32 %v851, 2147483648
    %v868 = vxor.u32 %v852, 2147483648
    %v869 = vxor.u32 %v853, 2147483648
    %v870 = vxor.u32 %v854, 2147483648
    %v871 = vmul.f32 %v855, 1.442695
    %v872 = vpow.pop %v871
    %v873 = vmul.f32 %v856, 1.442695
    %v874 = vpow.pop %v873
    %v875 = vmul.f32 %v857, 1.442695
    %v876 = vpow.pop %v875
    %v877 = vmul.f32 %v858, 1.442695
    %v878 = vpow.pop %v877
    %v879 = vmul.f32 %v859, 1.442695
    %v880 = vpow.pop %v879
    %v881 = vmul.f32 %v860, 1.442695
    %v882 = vpow.pop %v881
    %v883 = vmul.f32 %v861, 1.442695
    %v884 = vpow.pop %v883
    %v885 = vmul.f32 %v862, 1.442695
    %v886 = vpow.pop %v885
    %v887 = vmul.f32 %v863, 1.442695
    %v888 = vpow.pop %v887
    %v889 = vmul.f32 %v864, 1.442695
    %v890 = vpow.pop %v889
    %v891 = vmul.f32 %v865, 1.442695
    %v892 = vpow.pop %v891
    %v893 = vmul.f32 %v866, 1.442695
    %v894 = vpow.pop %v893
    %v895 = vmul.f32 %v867, 1.442695
    %v896 = vpow.pop %v895
    %v897 = vmul.f32 %v868, 1.442695
    %v898 = vpow.pop %v897
    %v899 = vmul.f32 %v869, 1.442695
    %v900 = vpow.pop %v899
    %v901 = vmul.f32 %v870, 1.442695
    %v902 = vpow.pop %v901
    %v903 = vadd.f32 %v872, 1.0
    %v904 = vadd.f32 %v874, 1.0
    %v905 = vadd.f32 %v876, 1.0
    %v906 = vadd.f32 %v878, 1.0
    %v907 = vadd.f32 %v880, 1.0
    %v908 = vadd.f32 %v882, 1.0
    %v909 = vadd.f32 %v884, 1.0
    %v910 = vadd.f32 %v886, 1.0
    %v911 = vadd.f32 %v888, 1.0
    %v912 = vadd.f32 %v890, 1.0
    %v913 = vadd.f32 %v892, 1.0
    %v914 = vadd.f32 %v894, 1.0
    %v915 = vadd.f32 %v896, 1.0
    %v916 = vadd.f32 %v898, 1.0
    %v917 = vadd.f32 %v900, 1.0
    %v918 = vadd.f32 %v902, 1.0
    %v919 = vrcp.pop %v903
    %v920 = vmul.f32 1.0, %v919
    %v921 = vrcp.pop %v904
    %v922 = vmul.f32 1.0, %v921
    %v923 = vrcp.pop %v905
    %v924 = vmul.f32 1.0, %v923
    %v925 = vrcp.pop %v906
    %v926 = vmul.f32 1.0, %v925
    %v927 = vrcp.pop %v907
    %v928 = vmul.f32 1.0, %v927
    %v929 = vrcp.pop %v908
    %v930 = vmul.f32 1.0, %v929
    %v931 = vrcp.pop %v909
    %v932 = vmul.f32 1.0, %v931
    %v933 = vrcp.pop %v910
    %v934 = vmul.f32 1.0, %v933
    %v935 = vrcp.pop %v911
    %v936 = vmul.f32 1.0, %v935
    %v937 = vrcp.pop %v912
    %v938 = vmul.f32 1.0, %v937
    %v939 = vrcp.pop %v913
    %v940 = vmul.f32 1.0, %v939
    %v941 = vrcp.pop %v914
    %v942 = vmul.f32 1.0, %v941
    %v943 = vrcp.pop %v915
    %v944 = vmul.f32 1.0, %v943
    %v945 = vrcp.pop %v916
    %v946 = vmul.f32 1.0, %v945
    %v947 = vrcp.pop %v917
    %v948 = vmul.f32 1.0, %v947
    %v949 = vrcp.pop %v918
    %v950 = vmul.f32 1.0, %v949
    %v967 = vlaneseq
    %v968 = vand.u32 %v967, 127
    %v969 = vlaneseq
    %v970 = vshrl.u32 %v969, 7
    %v971 = vsub.s32 %v968, %v970
    %v972 = vrot.slane %v920, %v971
    %v973 = vadd.s32 %v968, 4294967288
    %v974 = vlaneseq
    %v975 = vshrl.u32 %v974, 7
    %v976 = vsub.s32 %v973, %v975
    %v977 = vrot.slane %v922, %v976
    %vm978 = vcmask 130112
    %v979 = vsel %vm978, %v977, %v972
    %v980 = vadd.s32 %v968, 4294967280
    %v981 = vlaneseq
    %v982 = vshrl.u32 %v981, 7
    %v983 = vsub.s32 %v980, %v982
    %v984 = vrot.slane %v924, %v983
    %vm985 = vcmask 195712
    %v986 = vsel %vm985, %v984, %v979
    %v987 = vadd.s32 %v968, 4294967272
    %v988 = vlaneseq
    %v989 = vshrl.u32 %v988, 7
    %v990 = vsub.s32 %v987, %v989
    %v991 = vrot.slane %v926, %v990
    %vm992 = vcmask 261312
    %v993 = vsel %vm992, %v991, %v986
    %v994 = vadd.s32 %v968, 4294967264
    %v995 = vlaneseq
    %v996 = vshrl.u32 %v995, 7
    %v997 = vsub.s32 %v994, %v996
    %v998 = vrot.slane %v928, %v997
    %vm999 = vcmask 326912
    %v1000 = vsel %vm999, %v998, %v993
    %v1001 = vadd.s32 %v968, 4294967256
    %v1002 = vlaneseq
    %v1003 = vshrl.u32 %v1002, 7
    %v1004 = vsub.s32 %v1001, %v1003
    %v1005 = vrot.slane %v930, %v1004
    %vm1006 = vcmask 392512
    %v1007 = vsel %vm1006, %v1005, %v1000
    %v1008 = vadd.s32 %v968, 4294967248
    %v1009 = vlaneseq
    %v1010 = vshrl.u32 %v1009, 7
    %v1011 = vsub.s32 %v1008, %v1010
    %v1012 = vrot.slane %v932, %v1011
    %vm1013 = vcmask 458112
    %v1014 = vsel %vm1013, %v1012, %v1007
    %v1015 = vadd.s32 %v968, 4294967240
    %v1016 = vlaneseq
    %v1017 = vshrl.u32 %v1016, 7
    %v1018 = vsub.s32 %v1015, %v1017
    %v1019 = vrot.slane %v934, %v1018
    %vm1020 = vcmask 523712
    %v1021 = vsel %vm1020, %v1019, %v1014
    %v1022 = vadd.s32 %v968, 4294967232
    %v1023 = vlaneseq
    %v1024 = vshrl.u32 %v1023, 7
    %v1025 = vsub.s32 %v1022, %v1024
    %v1026 = vrot.slane %v936, %v1025
    %vm1027 = vcmask 589312
    %v1028 = vsel %vm1027, %v1026, %v1021
    %v1029 = vadd.s32 %v968, 4294967224
    %v1030 = vlaneseq
    %v1031 = vshrl.u32 %v1030, 7
    %v1032 = vsub.s32 %v1029, %v1031
    %v1033 = vrot.slane %v938, %v1032
    %vm1034 = vcmask 654912
    %v1035 = vsel %vm1034, %v1033, %v1028
    %v1036 = vadd.s32 %v968, 4294967216
    %v1037 = vlaneseq
    %v1038 = vshrl.u32 %v1037, 7
    %v1039 = vsub.s32 %v1036, %v1038
    %v1040 = vrot.slane %v940, %v1039
    %vm1041 = vcmask 720512
    %v1042 = vsel %vm1041, %v1040, %v1035
    %v1043 = vadd.s32 %v968, 4294967208
    %v1044 = vlaneseq
    %v1045 = vshrl.u32 %v1044, 7
    %v1046 = vsub.s32 %v1043, %v1045
    %v1047 = vrot.slane %v942, %v1046
    %vm1048 = vcmask 786112
    %v1049 = vsel %vm1048, %v1047, %v1042
    %v1050 = vadd.s32 %v968, 4294967200
    %v1051 = vlaneseq
    %v1052 = vshrl.u32 %v1051, 7
    %v1053 = vsub.s32 %v1050, %v1052
    %v1054 = vrot.slane %v944, %v1053
    %vm1055 = vcmask 851712
    %v1056 = vsel %vm1055, %v1054, %v1049
    %v1057 = vadd.s32 %v968, 4294967192
    %v1058 = vlaneseq
    %v1059 = vshrl.u32 %v1058, 7
    %v1060 = vsub.s32 %v1057, %v1059
    %v1061 = vrot.slane %v946, %v1060
    %vm1062 = vcmask 917312
    %v1063 = vsel %vm1062, %v1061, %v1056
    %v1064 = vadd.s32 %v968, 4294967184
    %v1065 = vlaneseq
    %v1066 = vshrl.u32 %v1065, 7
    %v1067 = vsub.s32 %v1064, %v1066
    %v1068 = vrot.slane %v948, %v1067
    %vm1069 = vcmask 982912
    %v1070 = vsel %vm1069, %v1068, %v1063
    %v1071 = vadd.s32 %v968, 4294967176
    %v1072 = vlaneseq
    %v1073 = vshrl.u32 %v1072, 7
    %v1074 = vsub.s32 %v1071, %v1073
    %v1075 = vrot.slane %v950, %v1074
    %vm1076 = vcmask 1048512
    %v1077 = vsel %vm1076, %v1075, %v1070
    %1079 = vst [vmem:[#allocation3] sm:$0x1] %v1077
    // Predicated region
    $region22: #{tpu_custom_call.1} parent=1 // pred_check
      _
    $region23: #{tpu_custom_call.1} parent=1 // pred_check_branch
      %1081 = sbr.rel (0) target = $region25
    $region24: #{tpu_custom_call.1} parent=1 // pred_region
      %s1083 = ssub.s32 16, 16
      %1084 = vsyncadd [#allocation4], %s1083
      %s1086 = sshll.u32 [#allocation3], 4
      %s1087 = int_to_ptr.vmem [resolvable:$true] %s1086
      %1089 = dma.vmem_to_hbm [thread:$0]  %s1087, 16, %s5, [#allocation4]
    $region25: #{tpu_custom_call.1} parent=1 // pred_fallthru
      _
    // Predicated region
    $region26: #{tpu_custom_call.1} parent=1 // pred_check
      _
    $region27: #{tpu_custom_call.1} parent=1 // pred_check_branch
      %1091 = sbr.rel (0) target = $region29
    $region28: #{tpu_custom_call.1} parent=1 // pred_region
      %1092 = dma.done [#allocation4], 16
    $region29: #{tpu_custom_call.1} parent=1 // pred_fallthru
      _
    %1093 = vsyncpa [#allocation4], 1

</llo_original>
